<compile_context>
chip_gen: v5e
topology: v5e:2x2
jax: 0.10.0
libtpu: 0.0.40
codegen_flags: <defaults>
</compile_context>

<pallas_src>
import functools

import numpy as np
import jax
import jax.numpy as jnp
from jax.experimental import pallas as pl
from jax.experimental.pallas import tpu as pltpu


def _sigmoid(x):
    # 1/(1+exp(-x)) -> EUP exp + VPU; identical math used in the reference.
    return 1.0 / (1.0 + jnp.exp(-x))


# --------------------------------------------------------------------------
# Fused Pallas kernel: LSTM recurrence + masked mean pooling
# --------------------------------------------------------------------------

def _lstm_pool_kernel(xT_ref, mask_ref, wih_ref, whh_ref, b_ref,
                      out_ref, xg_ref, *, hidden):
    # xT_ref:   (L, TB, V)    time-major input slab for this batch block
    # mask_ref: (L, TB, 1)    float mask (time-major)
    # wih_ref:  (V, 4H)       W_ih^T   (VMEM-resident across the grid)
    # whh_ref:  (H, 4H)       W_hh^T   (VMEM-resident across the grid)
    # b_ref:    (1, 4H)       b_ih + b_hh
    # out_ref:  (TB, H)       pooled output
    # xg_ref:   (L, TB, 4H)   VMEM scratch: precomputed input projections
    L, TB, V = xT_ref.shape
    H = hidden

    # ---- Stage 1: one big MXU matmul for the input projection of all steps.
    x2d = xT_ref[...].reshape(L * TB, V)
    xg = jnp.dot(x2d, wih_ref[...], preferred_element_type=jnp.float32)
    xg = xg + b_ref[...]
    xg_ref[...] = xg.reshape(L, TB, 4 * H)

    whh = whh_ref[...]                                  # (H, 4H), stays in VMEM

    # ---- Stage 2: sequential recurrence + fused masked accumulation (VPU).
    def step(t, carry):
        h, c, acc = carry                               # each (TB, H) f32
        gates = xg_ref[t] + jnp.dot(h, whh, preferred_element_type=jnp.float32)
        i_g = _sigmoid(gates[:, 0 * H:1 * H])           # PyTorch gate order i,f,g,o
        f_g = _sigmoid(gates[:, 1 * H:2 * H])
        g_g = jnp.tanh(gates[:, 2 * H:3 * H])
        o_g = _sigmoid(gates[:, 3 * H:4 * H])
        c = f_g * c + i_g * g_g
        h = o_g * jnp.tanh(c)
        acc = acc + mask_ref[t] * h                     # (TB,1) * (TB,H)
        return h, c, acc

    zeros = jnp.zeros((TB, H), jnp.float32)
    _, _, acc = jax.lax.fori_loop(0, L, step, (zeros, zeros, zeros))

    # ---- Stage 3: masked mean (clamp matches torch.clamp(min=1e-9)).
    denom = jnp.maximum(jnp.sum(mask_ref[...], axis=0), 1e-9)   # (TB, 1)
    out_ref[...] = (acc / denom).astype(out_ref.dtype)


# --------------------------------------------------------------------------
# Wrapper
# --------------------------------------------------------------------------

def lstm_pooling_forward(params, token_embeddings, attention_mask):
    """token_embeddings: (B, L, V), attention_mask: (B, L) -> ((B, V), None)."""
    wih_t, whh_t, bias = params                         # (V,4H), (H,4H), (1,4H)
    B, L, V = token_embeddings.shape
    H = V
    assert wih_t.shape == (V, 4 * H) and whh_t.shape == (H, 4 * H)

    # Batch block per grid step (v7x megacore can shard these).
    TB = 8 if (B > 8 and B % 8 == 0) else B
    assert B % TB == 0

    # Glue: time-major views so xg / mask are indexed by a leading time axis.
    xT = jnp.transpose(token_embeddings, (1, 0, 2)).astype(jnp.float32)     # (L,B,V)
    mask3 = jnp.transpose(attention_mask.astype(jnp.float32))[:, :, None]   # (L,B,1)

    out = pl.pallas_call(
        functools.partial(_lstm_pool_kernel, hidden=H),
        out_shape=jax.ShapeDtypeStruct((B, H), jnp.float32),
        grid=(B // TB,),
        in_specs=[
            pl.BlockSpec((L, TB, V), lambda i: (0, i, 0)),
            pl.BlockSpec((L, TB, 1), lambda i: (0, i, 0)),
            # weights/bias: index_map ignores the grid index -> resident in VMEM
            pl.BlockSpec((V, 4 * H), lambda i: (0, 0)),
            pl.BlockSpec((H, 4 * H), lambda i: (0, 0)),
            pl.BlockSpec((1, 4 * H), lambda i: (0, 0)),
        ],
        out_specs=pl.BlockSpec((TB, H), lambda i: (i, 0)),
        scratch_shapes=[pltpu.VMEM((L, TB, 4 * H), jnp.float32)],
        compiler_params=pltpu.CompilerParams(
            dimension_semantics=("parallel",)),
    )(xT, mask3, wih_t, whh_t, bias)

    # TODO(synk): the full per-step sequence `result` and (hn, cn) are not
    # materialized (PyTorch forward only returns the pooled output and None).
    return out, None


# --------------------------------------------------------------------------
# Deterministic parameter construction (PyTorch LSTM default init)
# --------------------------------------------------------------------------

def init_params(vocab_size, key):
    H = vocab_size
    bound = 1.0 / np.sqrt(H)
    k1, k2, k3, k4 = jax.random.split(key, 4)
    w_ih = jax.random.uniform(k1, (4 * H, H), jnp.float32, -bound, bound)
    w_hh = jax.random.uniform(k2, (4 * H, H), jnp.float32, -bound, bound)
    b_ih = jax.random.uniform(k3, (4 * H,), jnp.float32, -bound, bound)
    b_hh = jax.random.uniform(k4, (4 * H,), jnp.float32, -bound, bound)
    return (jnp.transpose(w_ih),                        # (V, 4H)
            jnp.transpose(w_hh),                        # (H, 4H)
            (b_ih + b_hh).reshape(1, 4 * H))            # (1, 4H)


# --------------------------------------------------------------------------
# Pure-JAX reference (for a correctness sanity check)
# --------------------------------------------------------------------------

def lstm_pooling_reference(params, token_embeddings, attention_mask):
    wih_t, whh_t, bias = params
    B, L, V = token_embeddings.shape
    H = V

    def cell(carry, x_t):
        h, c = carry
        gates = x_t @ wih_t + h @ whh_t + bias[0]
        i_g = _sigmoid(gates[:, 0 * H:1 * H])
        f_g = _sigmoid(gates[:, 1 * H:2 * H])
        g_g = jnp.tanh(gates[:, 2 * H:3 * H])
        o_g = _sigmoid(gates[:, 3 * H:4 * H])
        c = f_g * c + i_g * g_g
        h = o_g * jnp.tanh(c)
        return (h, c), h

    xT = jnp.transpose(token_embeddings, (1, 0, 2)).astype(jnp.float32)
    init = (jnp.zeros((B, H), jnp.float32), jnp.zeros((B, H), jnp.float32))
    _, hs = jax.lax.scan(cell, init, xT)                # (L, B, H)
    result = jnp.transpose(hs, (1, 0, 2))               # (B, L, H)
    m = attention_mask.astype(jnp.float32)[..., None]   # (B, L, 1)
    s = jnp.sum(result * m, axis=1)
    d = jnp.maximum(jnp.sum(m, axis=1), 1e-9)
    return s / d


# --------------------------------------------------------------------------

if __name__ == "__main__":
    vocab_size = 128      # hidden == input size; lane-aligned small test size
    batch, seq_len = 4, 16

    key = jax.random.PRNGKey(0)
    k_emb, k_par = jax.random.split(key)

    token_embeddings = jax.random.normal(
        k_emb, (batch, seq_len, vocab_size), jnp.float32)
    attention_mask = (jnp.ones((batch, seq_len), jnp.int32)
                      .at[0, 10:].set(0)
                      .at[1, 5:].set(0))

    params = init_params(vocab_size, k_par)

    output, aux = jax.jit(lstm_pooling_forward)(
        params, token_embeddings, attention_mask)
    jax.block_until_ready(output)

    ref = lstm_pooling_reference(params, token_embeddings, attention_mask)

    assert output.shape == (batch, vocab_size)
    assert aux is None
    assert bool(jnp.all(jnp.isfinite(output)))
    assert bool(jnp.allclose(output, ref, atol=2e-2, rtol=2e-2)), (
        float(jnp.max(jnp.abs(output - ref))))
    print("KERNEL_OK")
</pallas_src>

<mosaic_0001>
module attributes {stable_mosaic.version = 11 : i64} {
  func.func @_lstm_pool_kernel(%arg0: i32, %arg1: memref<16x4x128xf32, #tpu.memory_space<vmem>>, %arg2: memref<16x4x1xf32, #tpu.memory_space<vmem>>, %arg3: memref<128x512xf32, #tpu.memory_space<vmem>>, %arg4: memref<128x512xf32, #tpu.memory_space<vmem>>, %arg5: memref<1x512xf32, #tpu.memory_space<vmem>>, %arg6: memref<4x128xf32, #tpu.memory_space<vmem>>, %arg7: memref<16x4x512xf32, #tpu.memory_space<vmem>>) attributes {dimension_semantics = [#tpu.dimension_semantics<parallel>], iteration_bounds = array<i64: 1>, scalar_prefetch = 0 : i64, scratch_operands = 1 : i64, tpu.core_type = #tpu.core_type<tc>, window_params = [{transform_indices = @transform_0, window_bounds = array<i64: 16, 4, 128>}, {transform_indices = @transform_1, window_bounds = array<i64: 16, 4, 1>}, {pipeline_mode = #tpu.pipeline_mode<synchronous>, transform_indices = @transform_2, window_bounds = array<i64: 128, 512>}, {pipeline_mode = #tpu.pipeline_mode<synchronous>, transform_indices = @transform_3, window_bounds = array<i64: 128, 512>}, {pipeline_mode = #tpu.pipeline_mode<synchronous>, transform_indices = @transform_4, window_bounds = array<i64: 1, 512>}, {transform_indices = @transform_5, window_bounds = array<i64: 4, 128>}]} {
    %c0 = arith.constant 0 : index
    %c0_0 = arith.constant 0 : index
    %c0_1 = arith.constant 0 : index
    %0 = vector.load %arg1[%c0, %c0_0, %c0_1] : memref<16x4x128xf32, #tpu.memory_space<vmem>>, vector<16x4x128xf32>
    %1 = vector.shape_cast %0 : vector<16x4x128xf32> to vector<64x128xf32>
    %c0_2 = arith.constant 0 : index
    %c0_3 = arith.constant 0 : index
    %2 = vector.load %arg3[%c0_2, %c0_3] : memref<128x512xf32, #tpu.memory_space<vmem>>, vector<128x512xf32>
    %cst = arith.constant dense<0.000000e+00> : vector<64x512xf32>
    %3 = tpu.matmul %1, %2, %cst {dimension_numbers = #tpu.dot_dimension_numbers<[1], [0], [0], [1], [0, 0, 1, 1], [], []>} : vector<64x128xf32>, vector<128x512xf32>, vector<64x512xf32> -> vector<64x512xf32>
    %c0_4 = arith.constant 0 : index
    %c0_5 = arith.constant 0 : index
    %4 = vector.load %arg5[%c0_4, %c0_5] : memref<1x512xf32, #tpu.memory_space<vmem>>, vector<1x512xf32>
    %5 = vector.broadcast %4 : vector<1x512xf32> to vector<64x512xf32>
    %6 = arith.addf %3, %5 : vector<64x512xf32>
    %7 = vector.shape_cast %6 : vector<64x512xf32> to vector<16x4x512xf32>
    %c0_6 = arith.constant 0 : index
    %c0_7 = arith.constant 0 : index
    %c0_8 = arith.constant 0 : index
    %8 = vector.load %arg7[%c0_6, %c0_7, %c0_8] : memref<16x4x512xf32, #tpu.memory_space<vmem>>, vector<16x4x512xf32>
    tpu.vector_store %arg7[%c0_6, %c0_7, %c0_8], %7 {strides = array<i32>} : memref<16x4x512xf32, #tpu.memory_space<vmem>>, vector<16x4x512xf32>,
    %c0_9 = arith.constant 0 : index
    %c0_10 = arith.constant 0 : index
    %9 = vector.load %arg4[%c0_9, %c0_10] : memref<128x512xf32, #tpu.memory_space<vmem>>, vector<128x512xf32>
    %cst_11 = arith.constant 0.000000e+00 : f32
    %10 = vector.broadcast %cst_11 : f32 to vector<4x128xf32>
    %c0_i32 = arith.constant 0 : i32
    %c16_i32 = arith.constant 16 : i32
    %11 = arith.addi %c0_i32, %c16_i32 : i32
    %c1_i32 = arith.constant 1 : i32
    %12:3 = scf.for %arg8 = %c0_i32 to %11 step %c1_i32 iter_args(%arg9 = %10, %arg10 = %10, %arg11 = %10) -> (vector<4x128xf32>, vector<4x128xf32>, vector<4x128xf32>)  : i32 {
      %20 = arith.index_cast %arg8 : i32 to index
      %c0_20 = arith.constant 0 : index
      %c0_21 = arith.constant 0 : index
      %21 = vector.load %arg7[%20, %c0_20, %c0_21] : memref<16x4x512xf32, #tpu.memory_space<vmem>>, vector<1x4x512xf32>
      %22 = vector.shape_cast %21 : vector<1x4x512xf32> to vector<4x512xf32>
      %cst_22 = arith.constant dense<0.000000e+00> : vector<4x512xf32>
      %23 = tpu.matmul %arg9, %9, %cst_22 {dimension_numbers = #tpu.dot_dimension_numbers<[1], [0], [0], [1], [0, 0, 1, 1], [], []>} : vector<4x128xf32>, vector<128x512xf32>, vector<4x512xf32> -> vector<4x512xf32>
      %24 = arith.addf %22, %23 : vector<4x512xf32>
      %25 = vector.extract_strided_slice %24 {offsets = [0, 0], sizes = [4, 128], strides = [1, 1]} : vector<4x512xf32> to vector<4x128xf32>
      %cst_23 = arith.constant 0.000000e+00 : f32
      %26 = vector.broadcast %cst_23 : f32 to vector<4x128xf32>
      %27 = arith.subf %26, %25 : vector<4x128xf32>
      %28 = math.exp %27 : vector<4x128xf32>
      %cst_24 = arith.constant 1.000000e+00 : f32
      %29 = vector.broadcast %cst_24 : f32 to vector<4x128xf32>
      %30 = arith.addf %29, %28 : vector<4x128xf32>
      %cst_25 = arith.constant 1.000000e+00 : f32
      %31 = vector.broadcast %cst_25 : f32 to vector<4x128xf32>
      %32 = arith.divf %31, %30 : vector<4x128xf32>
      %33 = vector.extract_strided_slice %24 {offsets = [0, 128], sizes = [4, 128], strides = [1, 1]} : vector<4x512xf32> to vector<4x128xf32>
      %cst_26 = arith.constant 0.000000e+00 : f32
      %34 = vector.broadcast %cst_26 : f32 to vector<4x128xf32>
      %35 = arith.subf %34, %33 : vector<4x128xf32>
      %36 = math.exp %35 : vector<4x128xf32>
      %cst_27 = arith.constant 1.000000e+00 : f32
      %37 = vector.broadcast %cst_27 : f32 to vector<4x128xf32>
      %38 = arith.addf %37, %36 : vector<4x128xf32>
      %cst_28 = arith.constant 1.000000e+00 : f32
      %39 = vector.broadcast %cst_28 : f32 to vector<4x128xf32>
      %40 = arith.divf %39, %38 : vector<4x128xf32>
      %41 = vector.extract_strided_slice %24 {offsets = [0, 256], sizes = [4, 128], strides = [1, 1]} : vector<4x512xf32> to vector<4x128xf32>
      %42 = math.tanh %41 : vector<4x128xf32>
      %43 = vector.extract_strided_slice %24 {offsets = [0, 384], sizes = [4, 128], strides = [1, 1]} : vector<4x512xf32> to vector<4x128xf32>
      %cst_29 = arith.constant 0.000000e+00 : f32
      %44 = vector.broadcast %cst_29 : f32 to vector<4x128xf32>
      %45 = arith.subf %44, %43 : vector<4x128xf32>
      %46 = math.exp %45 : vector<4x128xf32>
      %cst_30 = arith.constant 1.000000e+00 : f32
      %47 = vector.broadcast %cst_30 : f32 to vector<4x128xf32>
      %48 = arith.addf %47, %46 : vector<4x128xf32>
      %cst_31 = arith.constant 1.000000e+00 : f32
      %49 = vector.broadcast %cst_31 : f32 to vector<4x128xf32>
      %50 = arith.divf %49, %48 : vector<4x128xf32>
      %51 = arith.mulf %40, %arg10 : vector<4x128xf32>
      %52 = arith.mulf %32, %42 : vector<4x128xf32>
      %53 = arith.addf %51, %52 : vector<4x128xf32>
      %54 = math.tanh %53 : vector<4x128xf32>
      %55 = arith.mulf %50, %54 : vector<4x128xf32>
      %56 = arith.index_cast %arg8 : i32 to index
      %c0_32 = arith.constant 0 : index
      %c0_33 = arith.constant 0 : index
      %57 = vector.load %arg2[%56, %c0_32, %c0_33] : memref<16x4x1xf32, #tpu.memory_space<vmem>>, vector<1x4x1xf32>
      %58 = vector.shape_cast %57 : vector<1x4x1xf32> to vector<4x1xf32>
      %59 = vector.broadcast %58 : vector<4x1xf32> to vector<4x128xf32>
      %60 = arith.mulf %59, %55 : vector<4x128xf32>
      %61 = arith.addf %arg11, %60 : vector<4x128xf32>
      scf.yield %55, %53, %61 : vector<4x128xf32>, vector<4x128xf32>, vector<4x128xf32>
    }
    %c16_i32_12 = arith.constant 16 : i32
    %c0_13 = arith.constant 0 : index
    %c0_14 = arith.constant 0 : index
    %c0_15 = arith.constant 0 : index
    %13 = vector.load %arg2[%c0_13, %c0_14, %c0_15] : memref<16x4x1xf32, #tpu.memory_space<vmem>>, vector<16x4x1xf32>
    %cst_16 = arith.constant dense<0.000000e+00> : vector<4x1xf32>
    %14 = vector.multi_reduction <add>, %13, %cst_16 [0] : vector<16x4x1xf32> to vector<4x1xf32>
    %cst_17 = arith.constant 9.99999971E-10 : f32
    %15 = vector.broadcast %cst_17 : f32 to vector<4x1xf32>
    %16 = arith.maximumf %14, %15 : vector<4x1xf32>
    %17 = vector.broadcast %16 : vector<4x1xf32> to vector<4x128xf32>
    %18 = arith.divf %12#2, %17 : vector<4x128xf32>
    %c0_18 = arith.constant 0 : index
    %c0_19 = arith.constant 0 : index
    %19 = vector.load %arg6[%c0_18, %c0_19] : memref<4x128xf32, #tpu.memory_space<vmem>>, vector<4x128xf32>
    tpu.vector_store %arg6[%c0_18, %c0_19], %18 {strides = array<i32>} : memref<4x128xf32, #tpu.memory_space<vmem>>, vector<4x128xf32>,
    return
  }
  func.func @transform_0(%arg0: i32) -> (i32, i32, i32) {
    %c0_i32 = arith.constant 0 : i32
    %c0_i32_0 = arith.constant 0 : i32
    %c0_i32_1 = arith.constant 0 : i32
    return %c0_i32, %arg0, %c0_i32_0 : i32, i32, i32
  }
  func.func @transform_1(%arg0: i32) -> (i32, i32, i32) {
    %c0_i32 = arith.constant 0 : i32
    %c0_i32_0 = arith.constant 0 : i32
    %c0_i32_1 = arith.constant 0 : i32
    return %c0_i32, %arg0, %c0_i32_0 : i32, i32, i32
  }
  func.func @transform_2(%arg0: i32) -> (i32, i32) {
    %c0_i32 = arith.constant 0 : i32
    %c0_i32_0 = arith.constant 0 : i32
    %c0_i32_1 = arith.constant 0 : i32
    return %c0_i32, %c0_i32_0 : i32, i32
  }
  func.func @transform_3(%arg0: i32) -> (i32, i32) {
    %c0_i32 = arith.constant 0 : i32
    %c0_i32_0 = arith.constant 0 : i32
    %c0_i32_1 = arith.constant 0 : i32
    return %c0_i32, %c0_i32_0 : i32, i32
  }
  func.func @transform_4(%arg0: i32) -> (i32, i32) {
    %c0_i32 = arith.constant 0 : i32
    %c0_i32_0 = arith.constant 0 : i32
    %c0_i32_1 = arith.constant 0 : i32
    return %c0_i32, %c0_i32_0 : i32, i32
  }
  func.func @transform_5(%arg0: i32) -> (i32, i32) {
    %c0_i32 = arith.constant 0 : i32
    %c0_i32_0 = arith.constant 0 : i32
    return %arg0, %c0_i32 : i32, i32
  }
}

</mosaic_0001>

<llo_original>
// kernel: lstm_pooling_forward.1
$region0: #{lstm_pooling_forward.1}
  #allocation0 [shape = 'u32[]', space=smem, size = 0x4, offset = 0x4, fixed_abs, tag = 'smem constant byte address 0x4 - core index']
  #allocation1 [shape = 'u32[72,128]{1,0:T(1,128)}', space=vmem, size = 0x9000, scoped, tag = 'internal scratch']
  #allocation2 [shape = 'f32[16,4,512]{2,1,0:T(4,128)}', space=vmem, size = 0x20000, scoped, tag = 'scratch operand']
  %s0 = inlined_call_operand.vmem [shape: f32[16,4,128], index: 0, kind: input, shape index: {}]
  %s1 = inlined_call_operand.vmem [shape: f32[16,4,1], index: 1, kind: input, shape index: {}]
  %s2 = inlined_call_operand.hbm [shape: f32[128,512], index: 2, kind: input, shape index: {}]
  %s3 = inlined_call_operand.hbm [shape: f32[128,512], index: 3, kind: input, shape index: {}]
  %s4 = inlined_call_operand.vmem [shape: f32[1,512], index: 4, kind: input, shape index: {}]
  %s5 = inlined_call_operand.hbm [shape: f32[4,128], index: 5, kind: output, shape index: {}]
  %s6 = sld [smem:[#allocation0]]
  $region45: #{lstm_pooling_forward.1} parent=0
    _
  %s8 = ssub.s32 1, %s6
  %s9 = scalar_select 0, %s8, %s6
  $region1: #{lstm_pooling_forward.1} parent=0
    #allocation3 [shape = 'u8[262144]{0}', space=vmem, size = 0x40000, scoped, tag = 'input window, operand 2, single buffered']
    #allocation4 [shape = 's32[1]{0}', space=sflag, size = 0x4, scoped, tag = 'scoped memory for lstm_pooling_forward.1']
    #allocation5 [shape = 's32[1]{0}', space=sflag, size = 0x4, scoped, tag = 'scoped memory for lstm_pooling_forward.1']
    #allocation6 [shape = 'u8[262144]{0}', space=vmem, size = 0x40000, scoped, tag = 'input window, operand 3, single buffered']
    #allocation7 [shape = 's32[1]{0}', space=sflag, size = 0x4, scoped, tag = 'scoped memory for lstm_pooling_forward.1']
    #allocation8 [shape = 'u8[2048]{0}', space=vmem, size = 0x800, scoped, tag = 'output window, operand 0, single buffered']
    %10 = vsyncpa [#allocation4], 0
    %11 = vsyncpa [#allocation7], 0
    %12 = vsyncpa [#allocation5], 0
    // Predicated region
    $region2: #{lstm_pooling_forward.1} parent=1 // pred_check
      _
    $region3: #{lstm_pooling_forward.1} parent=1 // pred_check_branch
      %14 = sbr.rel (0) target = $region5
    $region4: #{lstm_pooling_forward.1} parent=1 // pred_region
      _
    $region5: #{lstm_pooling_forward.1} parent=1 // pred_fallthru
      _
    // Predicated region
    $region6: #{lstm_pooling_forward.1} parent=1 // pred_check
      _
    $region7: #{lstm_pooling_forward.1} parent=1 // pred_check_branch
      %16 = sbr.rel (0) target = $region9
    $region8: #{lstm_pooling_forward.1} parent=1 // pred_region
      _
    $region9: #{lstm_pooling_forward.1} parent=1 // pred_fallthru
      _
    // Predicated region
    $region10: #{lstm_pooling_forward.1} parent=1 // pred_check
      _
    $region11: #{lstm_pooling_forward.1} parent=1 // pred_check_branch
      %18 = sbr.rel (0) target = $region13
    $region12: #{lstm_pooling_forward.1} parent=1 // pred_region
      %20 = vsyncadd [#allocation4], 0
      %s21 = sshll.u32 %s2, 4
      %s22 = int_to_ptr.hbm [resolvable:$true] %s21
      %s23 = sshll.u32 [#allocation3], 4
      %s24 = int_to_ptr.vmem [resolvable:$true] %s23
      %29 = dma.hbm_to_vmem [thread:$0]  %s22, 8192, %s24, [#allocation4], 512, 512, 32
    $region13: #{lstm_pooling_forward.1} parent=1 // pred_fallthru
      _
    // Predicated region
    $region14: #{lstm_pooling_forward.1} parent=1 // pred_check
      _
    $region15: #{lstm_pooling_forward.1} parent=1 // pred_check_branch
      %31 = sbr.rel (0) target = $region17
    $region16: #{lstm_pooling_forward.1} parent=1 // pred_region
      %33 = vsyncadd [#allocation7], 0
      %s34 = sshll.u32 %s3, 4
      %s35 = int_to_ptr.hbm [resolvable:$true] %s34
      %s36 = sshll.u32 [#allocation6], 4
      %s37 = int_to_ptr.vmem [resolvable:$true] %s36
      %42 = dma.hbm_to_vmem [thread:$0]  %s35, 8192, %s37, [#allocation7], 512, 512, 32
    $region17: #{lstm_pooling_forward.1} parent=1 // pred_fallthru
      _
    // Predicated region
    $region18: #{lstm_pooling_forward.1} parent=1 // pred_check
      _
    $region19: #{lstm_pooling_forward.1} parent=1 // pred_check_branch
      %44 = sbr.rel (0) target = $region21
    $region20: #{lstm_pooling_forward.1} parent=1 // pred_region
      _
    $region21: #{lstm_pooling_forward.1} parent=1 // pred_fallthru
      _
    // Predicated region
    $region22: #{lstm_pooling_forward.1} parent=1 // pred_check
      _
    $region23: #{lstm_pooling_forward.1} parent=1 // pred_check_branch
      %46 = sbr.rel (0) target = $region25
    $region24: #{lstm_pooling_forward.1} parent=1 // pred_region
      %48 = dma.done [#allocation4], 8192
    $region25: #{lstm_pooling_forward.1} parent=1 // pred_fallthru
      _
    // Predicated region
    $region26: #{lstm_pooling_forward.1} parent=1 // pred_check
      _
    $region27: #{lstm_pooling_forward.1} parent=1 // pred_check_branch
      %50 = sbr.rel (0) target = $region29
    $region28: #{lstm_pooling_forward.1} parent=1 // pred_region
      %52 = dma.done [#allocation7], 8192
    $region29: #{lstm_pooling_forward.1} parent=1 // pred_fallthru
      _
    %v53 = vld [vmem:[%s0] sm:$0xf]
    %v54 = vld [vmem:[%s0 + $0x4] sm:$0xf]
    %v55 = vld [vmem:[%s0 + $0x8] sm:$0xf]
    %v56 = vld [vmem:[%s0 + $0xc] sm:$0xf]
    %v57 = vld [vmem:[%s0 + $0x10] sm:$0xf]
    %v58 = vld [vmem:[%s0 + $0x14] sm:$0xf]
    %v59 = vld [vmem:[%s0 + $0x18] sm:$0xf]
    %v60 = vld [vmem:[%s0 + $0x1c] sm:$0xf]
    %v61 = vld [vmem:[%s0 + $0x20] sm:$0xf]
    %v62 = vld [vmem:[%s0 + $0x24] sm:$0xf]
    %v63 = vld [vmem:[%s0 + $0x28] sm:$0xf]
    %v64 = vld [vmem:[%s0 + $0x2c] sm:$0xf]
    %v65 = vld [vmem:[%s0 + $0x30] sm:$0xf]
    %v66 = vld [vmem:[%s0 + $0x34] sm:$0xf]
    %v67 = vld [vmem:[%s0 + $0x38] sm:$0xf]
    %v68 = vld [vmem:[%s0 + $0x3c] sm:$0xf]
    %v69 = vld [vmem:[#allocation3] sm:$0xff]
    %v70 = vld [vmem:[#allocation3 + $0x8] sm:$0xff]
    %v71 = vld [vmem:[#allocation3 + $0x10] sm:$0xff]
    %v72 = vld [vmem:[#allocation3 + $0x18] sm:$0xff]
    %v73 = vld [vmem:[#allocation3 + $0x20] sm:$0xff]
    %v74 = vld [vmem:[#allocation3 + $0x28] sm:$0xff]
    %v75 = vld [vmem:[#allocation3 + $0x30] sm:$0xff]
    %v76 = vld [vmem:[#allocation3 + $0x38] sm:$0xff]
    %v77 = vld [vmem:[#allocation3 + $0x40] sm:$0xff]
    %v78 = vld [vmem:[#allocation3 + $0x48] sm:$0xff]
    %v79 = vld [vmem:[#allocation3 + $0x50] sm:$0xff]
    %v80 = vld [vmem:[#allocation3 + $0x58] sm:$0xff]
    %v81 = vld [vmem:[#allocation3 + $0x60] sm:$0xff]
    %v82 = vld [vmem:[#allocation3 + $0x68] sm:$0xff]
    %v83 = vld [vmem:[#allocation3 + $0x70] sm:$0xff]
    %v84 = vld [vmem:[#allocation3 + $0x78] sm:$0xff]
    %v85 = vld [vmem:[#allocation3 + $0x80] sm:$0xff]
    %v86 = vld [vmem:[#allocation3 + $0x88] sm:$0xff]
    %v87 = vld [vmem:[#allocation3 + $0x90] sm:$0xff]
    %v88 = vld [vmem:[#allocation3 + $0x98] sm:$0xff]
    %v89 = vld [vmem:[#allocation3 + $0xa0] sm:$0xff]
    %v90 = vld [vmem:[#allocation3 + $0xa8] sm:$0xff]
    %v91 = vld [vmem:[#allocation3 + $0xb0] sm:$0xff]
    %v92 = vld [vmem:[#allocation3 + $0xb8] sm:$0xff]
    %v93 = vld [vmem:[#allocation3 + $0xc0] sm:$0xff]
    %v94 = vld [vmem:[#allocation3 + $0xc8] sm:$0xff]
    %v95 = vld [vmem:[#allocation3 + $0xd0] sm:$0xff]
    %v96 = vld [vmem:[#allocation3 + $0xd8] sm:$0xff]
    %v97 = vld [vmem:[#allocation3 + $0xe0] sm:$0xff]
    %v98 = vld [vmem:[#allocation3 + $0xe8] sm:$0xff]
    %v99 = vld [vmem:[#allocation3 + $0xf0] sm:$0xff]
    %v100 = vld [vmem:[#allocation3 + $0xf8] sm:$0xff]
    %v101 = vld [vmem:[#allocation3 + $0x100] sm:$0xff]
    %v102 = vld [vmem:[#allocation3 + $0x108] sm:$0xff]
    %v103 = vld [vmem:[#allocation3 + $0x110] sm:$0xff]
    %v104 = vld [vmem:[#allocation3 + $0x118] sm:$0xff]
    %v105 = vld [vmem:[#allocation3 + $0x120] sm:$0xff]
    %v106 = vld [vmem:[#allocation3 + $0x128] sm:$0xff]
    %v107 = vld [vmem:[#allocation3 + $0x130] sm:$0xff]
    %v108 = vld [vmem:[#allocation3 + $0x138] sm:$0xff]
    %v109 = vld [vmem:[#allocation3 + $0x140] sm:$0xff]
    %v110 = vld [vmem:[#allocation3 + $0x148] sm:$0xff]
    %v111 = vld [vmem:[#allocation3 + $0x150] sm:$0xff]
    %v112 = vld [vmem:[#allocation3 + $0x158] sm:$0xff]
    %v113 = vld [vmem:[#allocation3 + $0x160] sm:$0xff]
    %v114 = vld [vmem:[#allocation3 + $0x168] sm:$0xff]
    %v115 = vld [vmem:[#allocation3 + $0x170] sm:$0xff]
    %v116 = vld [vmem:[#allocation3 + $0x178] sm:$0xff]
    %v117 = vld [vmem:[#allocation3 + $0x180] sm:$0xff]
    %v118 = vld [vmem:[#allocation3 + $0x188] sm:$0xff]
    %v119 = vld [vmem:[#allocation3 + $0x190] sm:$0xff]
    %v120 = vld [vmem:[#allocation3 + $0x198] sm:$0xff]
    %v121 = vld [vmem:[#allocation3 + $0x1a0] sm:$0xff]
    %v122 = vld [vmem:[#allocation3 + $0x1a8] sm:$0xff]
    %v123 = vld [vmem:[#allocation3 + $0x1b0] sm:$0xff]
    %v124 = vld [vmem:[#allocation3 + $0x1b8] sm:$0xff]
    %v125 = vld [vmem:[#allocation3 + $0x1c0] sm:$0xff]
    %v126 = vld [vmem:[#allocation3 + $0x1c8] sm:$0xff]
    %v127 = vld [vmem:[#allocation3 + $0x1d0] sm:$0xff]
    %v128 = vld [vmem:[#allocation3 + $0x1d8] sm:$0xff]
    %v129 = vld [vmem:[#allocation3 + $0x1e0] sm:$0xff]
    %v130 = vld [vmem:[#allocation3 + $0x1e8] sm:$0xff]
    %v131 = vld [vmem:[#allocation3 + $0x1f0] sm:$0xff]
    %v132 = vld [vmem:[#allocation3 + $0x1f8] sm:$0xff]
    %v133 = vld [vmem:[%s4] sm:$0xf]
    %v135 = vperm.slane %v133, 0
    %v136 = vperm.slane %v133, 1
    %v137 = vperm.slane %v133, 2
    %v138 = vperm.slane %v133, 3
    %159 = vst [vmem:[#allocation1] ss:$2 sm:$0xff] %v53
    %s160 = scalar_lea.vmem [#allocation1], 1
    %161 = vst [vmem:[%s160] ss:$2 sm:$0xff] %v54
    %s162 = scalar_lea.vmem [#allocation1], 16
    %163 = vst [vmem:[%s162] ss:$2 sm:$0xff] %v55
    %s164 = scalar_lea.vmem [#allocation1], 17
    %165 = vst [vmem:[%s164] ss:$2 sm:$0xff] %v56
    %s166 = scalar_lea.vmem [#allocation1], 32
    %167 = vst [vmem:[%s166] ss:$2 sm:$0xff] %v57
    %s168 = scalar_lea.vmem [#allocation1], 33
    %169 = vst [vmem:[%s168] ss:$2 sm:$0xff] %v58
    %s170 = scalar_lea.vmem [#allocation1], 48
    %171 = vst [vmem:[%s170] ss:$2 sm:$0xff] %v59
    %s172 = scalar_lea.vmem [#allocation1], 49
    %173 = vst [vmem:[%s172] ss:$2 sm:$0xff] %v60
    %v174 = vld.sshfl [vmem:[#allocation1] sm:$0xff pattern:$0x75316420]
    %v175 = vld.sshfl [vmem:[#allocation1 + $0x10] sm:$0xff pattern:$0x75316420]
    %v176 = vld.sshfl [vmem:[#allocation1 + $0x20] sm:$0xff pattern:$0x75316420]
    %v177 = vld.sshfl [vmem:[#allocation1 + $0x30] sm:$0xff pattern:$0x75316420]
    %178 = vst [vmem:[#allocation1] ss:$2 sm:$0xff] %v61
    %179 = vst [vmem:[%s160] ss:$2 sm:$0xff] %v62
    %180 = vst [vmem:[%s162] ss:$2 sm:$0xff] %v63
    %181 = vst [vmem:[%s164] ss:$2 sm:$0xff] %v64
    %182 = vst [vmem:[%s166] ss:$2 sm:$0xff] %v65
    %183 = vst [vmem:[%s168] ss:$2 sm:$0xff] %v66
    %184 = vst [vmem:[%s170] ss:$2 sm:$0xff] %v67
    %185 = vst [vmem:[%s172] ss:$2 sm:$0xff] %v68
    %v186 = vld.sshfl [vmem:[#allocation1] sm:$0xff pattern:$0x75316420]
    %v187 = vld.sshfl [vmem:[#allocation1 + $0x10] sm:$0xff pattern:$0x75316420]
    %v188 = vld.sshfl [vmem:[#allocation1 + $0x20] sm:$0xff pattern:$0x75316420]
    %v189 = vld.sshfl [vmem:[#allocation1 + $0x30] sm:$0xff pattern:$0x75316420]
    %198 = vmatpush.msra.mxu0 %v129
    %199 = vmatpush.msra.mxu0 %v125
    %200 = vmatpush.msra.mxu0 %v121
    %201 = vmatpush.msra.mxu0 %v117
    %202 = vmatpush.msra.mxu0 %v113
    %203 = vmatpush.msra.mxu0 %v109
    %204 = vmatpush.msra.mxu0 %v105
    %205 = vmatpush.msra.mxu0 %v101
    %206 = vmatpush.msra.mxu0 %v97
    %207 = vmatpush.msra.mxu0 %v93
    %208 = vmatpush.msra.mxu0 %v89
    %209 = vmatpush.msra.mxu0 %v85
    %210 = vmatpush.msra.mxu0 %v81
    %211 = vmatpush.msra.mxu0 %v77
    %212 = vmatpush.msra.mxu0 %v73
    %213 = vmatpush.msra.mxu0 %v69
    %214 = vmatmul.f32.gmra.mxu0 %v174
    %v215 = vpop.f32.mrf.mxu0
    %v216 = vadd.f32 %v135, %v215
    %217 = vmatmul.f32.gmra.mxu0 %v175
    %v218 = vpop.f32.mrf.mxu0
    %v219 = vadd.f32 %v135, %v218
    %220 = vmatmul.f32.gmra.mxu0 %v176
    %v221 = vpop.f32.mrf.mxu0
    %v222 = vadd.f32 %v135, %v221
    %223 = vmatmul.f32.gmra.mxu0 %v177
    %v224 = vpop.f32.mrf.mxu0
    %v225 = vadd.f32 %v135, %v224
    %226 = vmatmul.f32.gmra.mxu0 %v186
    %v227 = vpop.f32.mrf.mxu0
    %v228 = vadd.f32 %v135, %v227
    %229 = vmatmul.f32.gmra.mxu0 %v187
    %v230 = vpop.f32.mrf.mxu0
    %v231 = vadd.f32 %v135, %v230
    %232 = vmatmul.f32.gmra.mxu0 %v188
    %v233 = vpop.f32.mrf.mxu0
    %v234 = vadd.f32 %v135, %v233
    %235 = vmatmul.f32.gmra.mxu0 %v189
    %v236 = vpop.f32.mrf.mxu0
    %v237 = vadd.f32 %v135, %v236
    %238 = vdwg.mxu0
    %239 = vmatpush.msra.mxu0 %v130
    %240 = vmatpush.msra.mxu0 %v126
    %241 = vmatpush.msra.mxu0 %v122
    %242 = vmatpush.msra.mxu0 %v118
    %243 = vmatpush.msra.mxu0 %v114
    %244 = vmatpush.msra.mxu0 %v110
    %245 = vmatpush.msra.mxu0 %v106
    %246 = vmatpush.msra.mxu0 %v102
    %247 = vmatpush.msra.mxu0 %v98
    %248 = vmatpush.msra.mxu0 %v94
    %249 = vmatpush.msra.mxu0 %v90
    %250 = vmatpush.msra.mxu0 %v86
    %251 = vmatpush.msra.mxu0 %v82
    %252 = vmatpush.msra.mxu0 %v78
    %253 = vmatpush.msra.mxu0 %v74
    %254 = vmatpush.msra.mxu0 %v70
    %255 = vmatmul.f32.gmra.mxu0 %v174
    %v256 = vpop.f32.mrf.mxu0
    %v257 = vadd.f32 %v136, %v256
    %258 = vmatmul.f32.gmra.mxu0 %v175
    %v259 = vpop.f32.mrf.mxu0
    %v260 = vadd.f32 %v136, %v259
    %261 = vmatmul.f32.gmra.mxu0 %v176
    %v262 = vpop.f32.mrf.mxu0
    %v263 = vadd.f32 %v136, %v262
    %264 = vmatmul.f32.gmra.mxu0 %v177
    %v265 = vpop.f32.mrf.mxu0
    %v266 = vadd.f32 %v136, %v265
    %267 = vmatmul.f32.gmra.mxu0 %v186
    %v268 = vpop.f32.mrf.mxu0
    %v269 = vadd.f32 %v136, %v268
    %270 = vmatmul.f32.gmra.mxu0 %v187
    %v271 = vpop.f32.mrf.mxu0
    %v272 = vadd.f32 %v136, %v271
    %273 = vmatmul.f32.gmra.mxu0 %v188
    %v274 = vpop.f32.mrf.mxu0
    %v275 = vadd.f32 %v136, %v274
    %276 = vmatmul.f32.gmra.mxu0 %v189
    %v277 = vpop.f32.mrf.mxu0
    %v278 = vadd.f32 %v136, %v277
    %279 = vdwg.mxu0
    %280 = vmatpush.msra.mxu0 %v131
    %281 = vmatpush.msra.mxu0 %v127
    %282 = vmatpush.msra.mxu0 %v123
    %283 = vmatpush.msra.mxu0 %v119
    %284 = vmatpush.msra.mxu0 %v115
    %285 = vmatpush.msra.mxu0 %v111
    %286 = vmatpush.msra.mxu0 %v107
    %287 = vmatpush.msra.mxu0 %v103
    %288 = vmatpush.msra.mxu0 %v99
    %289 = vmatpush.msra.mxu0 %v95
    %290 = vmatpush.msra.mxu0 %v91
    %291 = vmatpush.msra.mxu0 %v87
    %292 = vmatpush.msra.mxu0 %v83
    %293 = vmatpush.msra.mxu0 %v79
    %294 = vmatpush.msra.mxu0 %v75
    %295 = vmatpush.msra.mxu0 %v71
    %296 = vmatmul.f32.gmra.mxu0 %v174
    %v297 = vpop.f32.mrf.mxu0
    %v298 = vadd.f32 %v137, %v297
    %299 = vmatmul.f32.gmra.mxu0 %v175
    %v300 = vpop.f32.mrf.mxu0
    %v301 = vadd.f32 %v137, %v300
    %302 = vmatmul.f32.gmra.mxu0 %v176
    %v303 = vpop.f32.mrf.mxu0
    %v304 = vadd.f32 %v137, %v303
    %305 = vmatmul.f32.gmra.mxu0 %v177
    %v306 = vpop.f32.mrf.mxu0
    %v307 = vadd.f32 %v137, %v306
    %308 = vmatmul.f32.gmra.mxu0 %v186
    %v309 = vpop.f32.mrf.mxu0
    %v310 = vadd.f32 %v137, %v309
    %311 = vmatmul.f32.gmra.mxu0 %v187
    %v312 = vpop.f32.mrf.mxu0
    %v313 = vadd.f32 %v137, %v312
    %314 = vmatmul.f32.gmra.mxu0 %v188
    %v315 = vpop.f32.mrf.mxu0
    %v316 = vadd.f32 %v137, %v315
    %317 = vmatmul.f32.gmra.mxu0 %v189
    %v318 = vpop.f32.mrf.mxu0
    %v319 = vadd.f32 %v137, %v318
    %320 = vdwg.mxu0
    %321 = vmatpush.msra.mxu0 %v132
    %322 = vmatpush.msra.mxu0 %v128
    %323 = vmatpush.msra.mxu0 %v124
    %324 = vmatpush.msra.mxu0 %v120
    %325 = vmatpush.msra.mxu0 %v116
    %326 = vmatpush.msra.mxu0 %v112
    %327 = vmatpush.msra.mxu0 %v108
    %328 = vmatpush.msra.mxu0 %v104
    %329 = vmatpush.msra.mxu0 %v100
    %330 = vmatpush.msra.mxu0 %v96
    %331 = vmatpush.msra.mxu0 %v92
    %332 = vmatpush.msra.mxu0 %v88
    %333 = vmatpush.msra.mxu0 %v84
    %334 = vmatpush.msra.mxu0 %v80
    %335 = vmatpush.msra.mxu0 %v76
    %336 = vmatpush.msra.mxu0 %v72
    %337 = vmatmul.f32.gmra.mxu0 %v174
    %v338 = vpop.f32.mrf.mxu0
    %v339 = vadd.f32 %v138, %v338
    %340 = vmatmul.f32.gmra.mxu0 %v175
    %v341 = vpop.f32.mrf.mxu0
    %v342 = vadd.f32 %v138, %v341
    %343 = vmatmul.f32.gmra.mxu0 %v176
    %v344 = vpop.f32.mrf.mxu0
    %v345 = vadd.f32 %v138, %v344
    %346 = vmatmul.f32.gmra.mxu0 %v177
    %v347 = vpop.f32.mrf.mxu0
    %v348 = vadd.f32 %v138, %v347
    %349 = vmatmul.f32.gmra.mxu0 %v186
    %v350 = vpop.f32.mrf.mxu0
    %v351 = vadd.f32 %v138, %v350
    %352 = vmatmul.f32.gmra.mxu0 %v187
    %v353 = vpop.f32.mrf.mxu0
    %v354 = vadd.f32 %v138, %v353
    %355 = vmatmul.f32.gmra.mxu0 %v188
    %v356 = vpop.f32.mrf.mxu0
    %v357 = vadd.f32 %v138, %v356
    %358 = vmatmul.f32.gmra.mxu0 %v189
    %v359 = vpop.f32.mrf.mxu0
    %v360 = vadd.f32 %v138, %v359
    %361 = vdwg.mxu0
    %v394 = vrot.slane %v257, 4
    %v395 = vrot.slane %v339, 4
    %v396 = vrot.slane %v260, 4
    %v397 = vrot.slane %v342, 4
    %v398 = vrot.slane %v263, 4
    %v399 = vrot.slane %v345, 4
    %v400 = vrot.slane %v266, 4
    %v401 = vrot.slane %v348, 4
    %v402 = vrot.slane %v269, 4
    %v403 = vrot.slane %v351, 4
    %v404 = vrot.slane %v272, 4
    %v405 = vrot.slane %v354, 4
    %v406 = vrot.slane %v275, 4
    %v407 = vrot.slane %v357, 4
    %v408 = vrot.slane %v278, 4
    %v409 = vrot.slane %v360, 4
    %vm410 = vcmask 1043456
    %v411 = vsel %vm410, %v216, %v394
    %v412 = vsel %vm410, %v298, %v395
    %v413 = vsel %vm410, %v394, %v216
    %v414 = vrot.slane %v413, 4
    %v415 = vsel %vm410, %v395, %v298
    %v416 = vrot.slane %v415, 4
    %v417 = vsel %vm410, %v219, %v396
    %v418 = vsel %vm410, %v301, %v397
    %v419 = vsel %vm410, %v396, %v219
    %v420 = vrot.slane %v419, 4
    %v421 = vsel %vm410, %v397, %v301
    %v422 = vrot.slane %v421, 4
    %v423 = vsel %vm410, %v222, %v398
    %v424 = vsel %vm410, %v304, %v399
    %v425 = vsel %vm410, %v398, %v222
    %v426 = vrot.slane %v425, 4
    %v427 = vsel %vm410, %v399, %v304
    %v428 = vrot.slane %v427, 4
    %v429 = vsel %vm410, %v225, %v400
    %v430 = vsel %vm410, %v307, %v401
    %v431 = vsel %vm410, %v400, %v225
    %v432 = vrot.slane %v431, 4
    %v433 = vsel %vm410, %v401, %v307
    %v434 = vrot.slane %v433, 4
    %v435 = vsel %vm410, %v228, %v402
    %v436 = vsel %vm410, %v310, %v403
    %v437 = vsel %vm410, %v402, %v228
    %v438 = vrot.slane %v437, 4
    %v439 = vsel %vm410, %v403, %v310
    %v440 = vrot.slane %v439, 4
    %v441 = vsel %vm410, %v231, %v404
    %v442 = vsel %vm410, %v313, %v405
    %v443 = vsel %vm410, %v404, %v231
    %v444 = vrot.slane %v443, 4
    %v445 = vsel %vm410, %v405, %v313
    %v446 = vrot.slane %v445, 4
    %v447 = vsel %vm410, %v234, %v406
    %v448 = vsel %vm410, %v316, %v407
    %v449 = vsel %vm410, %v406, %v234
    %v450 = vrot.slane %v449, 4
    %v451 = vsel %vm410, %v407, %v316
    %v452 = vrot.slane %v451, 4
    %v453 = vsel %vm410, %v237, %v408
    %v454 = vsel %vm410, %v319, %v409
    %v455 = vsel %vm410, %v408, %v237
    %v456 = vrot.slane %v455, 4
    %v457 = vsel %vm410, %v409, %v319
    %v458 = vrot.slane %v457, 4
    %491 = vst [vmem:[#allocation2] sm:$0xff] %v411
    %492 = vst [vmem:[#allocation2 + $0x8] sm:$0xff] %v412
    %493 = vst [vmem:[#allocation2 + $0x10] sm:$0xff] %v414
    %494 = vst [vmem:[#allocation2 + $0x18] sm:$0xff] %v416
    %495 = vst [vmem:[#allocation2 + $0x20] sm:$0xff] %v417
    %496 = vst [vmem:[#allocation2 + $0x28] sm:$0xff] %v418
    %497 = vst [vmem:[#allocation2 + $0x30] sm:$0xff] %v420
    %498 = vst [vmem:[#allocation2 + $0x38] sm:$0xff] %v422
    %499 = vst [vmem:[#allocation2 + $0x40] sm:$0xff] %v423
    %500 = vst [vmem:[#allocation2 + $0x48] sm:$0xff] %v424
    %501 = vst [vmem:[#allocation2 + $0x50] sm:$0xff] %v426
    %502 = vst [vmem:[#allocation2 + $0x58] sm:$0xff] %v428
    %503 = vst [vmem:[#allocation2 + $0x60] sm:$0xff] %v429
    %504 = vst [vmem:[#allocation2 + $0x68] sm:$0xff] %v430
    %505 = vst [vmem:[#allocation2 + $0x70] sm:$0xff] %v432
    %506 = vst [vmem:[#allocation2 + $0x78] sm:$0xff] %v434
    %507 = vst [vmem:[#allocation2 + $0x80] sm:$0xff] %v435
    %508 = vst [vmem:[#allocation2 + $0x88] sm:$0xff] %v436
    %509 = vst [vmem:[#allocation2 + $0x90] sm:$0xff] %v438
    %510 = vst [vmem:[#allocation2 + $0x98] sm:$0xff] %v440
    %511 = vst [vmem:[#allocation2 + $0xa0] sm:$0xff] %v441
    %512 = vst [vmem:[#allocation2 + $0xa8] sm:$0xff] %v442
    %513 = vst [vmem:[#allocation2 + $0xb0] sm:$0xff] %v444
    %514 = vst [vmem:[#allocation2 + $0xb8] sm:$0xff] %v446
    %515 = vst [vmem:[#allocation2 + $0xc0] sm:$0xff] %v447
    %516 = vst [vmem:[#allocation2 + $0xc8] sm:$0xff] %v448
    %517 = vst [vmem:[#allocation2 + $0xd0] sm:$0xff] %v450
    %518 = vst [vmem:[#allocation2 + $0xd8] sm:$0xff] %v452
    %519 = vst [vmem:[#allocation2 + $0xe0] sm:$0xff] %v453
    %520 = vst [vmem:[#allocation2 + $0xe8] sm:$0xff] %v454
    %521 = vst [vmem:[#allocation2 + $0xf0] sm:$0xff] %v456
    %522 = vst [vmem:[#allocation2 + $0xf8] sm:$0xff] %v458
    %v523 = vld [vmem:[#allocation6] sm:$0xff]
    %v524 = vld [vmem:[#allocation6 + $0x8] sm:$0xff]
    %v525 = vld [vmem:[#allocation6 + $0x10] sm:$0xff]
    %v526 = vld [vmem:[#allocation6 + $0x18] sm:$0xff]
    %v527 = vld [vmem:[#allocation6 + $0x20] sm:$0xff]
    %v528 = vld [vmem:[#allocation6 + $0x28] sm:$0xff]
    %v529 = vld [vmem:[#allocation6 + $0x30] sm:$0xff]
    %v530 = vld [vmem:[#allocation6 + $0x38] sm:$0xff]
    %v531 = vld [vmem:[#allocation6 + $0x40] sm:$0xff]
    %v532 = vld [vmem:[#allocation6 + $0x48] sm:$0xff]
    %v533 = vld [vmem:[#allocation6 + $0x50] sm:$0xff]
    %v534 = vld [vmem:[#allocation6 + $0x58] sm:$0xff]
    %v535 = vld [vmem:[#allocation6 + $0x60] sm:$0xff]
    %v536 = vld [vmem:[#allocation6 + $0x68] sm:$0xff]
    %v537 = vld [vmem:[#allocation6 + $0x70] sm:$0xff]
    %v538 = vld [vmem:[#allocation6 + $0x78] sm:$0xff]
    %v539 = vld [vmem:[#allocation6 + $0x80] sm:$0xff]
    %v540 = vld [vmem:[#allocation6 + $0x88] sm:$0xff]
    %v541 = vld [vmem:[#allocation6 + $0x90] sm:$0xff]
    %v542 = vld [vmem:[#allocation6 + $0x98] sm:$0xff]
    %v543 = vld [vmem:[#allocation6 + $0xa0] sm:$0xff]
    %v544 = vld [vmem:[#allocation6 + $0xa8] sm:$0xff]
    %v545 = vld [vmem:[#allocation6 + $0xb0] sm:$0xff]
    %v546 = vld [vmem:[#allocation6 + $0xb8] sm:$0xff]
    %v547 = vld [vmem:[#allocation6 + $0xc0] sm:$0xff]
    %v548 = vld [vmem:[#allocation6 + $0xc8] sm:$0xff]
    %v549 = vld [vmem:[#allocation6 + $0xd0] sm:$0xff]
    %v550 = vld [vmem:[#allocation6 + $0xd8] sm:$0xff]
    %v551 = vld [vmem:[#allocation6 + $0xe0] sm:$0xff]
    %v552 = vld [vmem:[#allocation6 + $0xe8] sm:$0xff]
    %v553 = vld [vmem:[#allocation6 + $0xf0] sm:$0xff]
    %v554 = vld [vmem:[#allocation6 + $0xf8] sm:$0xff]
    %v555 = vld [vmem:[#allocation6 + $0x100] sm:$0xff]
    %v556 = vld [vmem:[#allocation6 + $0x108] sm:$0xff]
    %v557 = vld [vmem:[#allocation6 + $0x110] sm:$0xff]
    %v558 = vld [vmem:[#allocation6 + $0x118] sm:$0xff]
    %v559 = vld [vmem:[#allocation6 + $0x120] sm:$0xff]
    %v560 = vld [vmem:[#allocation6 + $0x128] sm:$0xff]
    %v561 = vld [vmem:[#allocation6 + $0x130] sm:$0xff]
    %v562 = vld [vmem:[#allocation6 + $0x138] sm:$0xff]
    %v563 = vld [vmem:[#allocation6 + $0x140] sm:$0xff]
    %v564 = vld [vmem:[#allocation6 + $0x148] sm:$0xff]
    %v565 = vld [vmem:[#allocation6 + $0x150] sm:$0xff]
    %v566 = vld [vmem:[#allocation6 + $0x158] sm:$0xff]
    %v567 = vld [vmem:[#allocation6 + $0x160] sm:$0xff]
    %v568 = vld [vmem:[#allocation6 + $0x168] sm:$0xff]
    %v569 = vld [vmem:[#allocation6 + $0x170] sm:$0xff]
    %v570 = vld [vmem:[#allocation6 + $0x178] sm:$0xff]
    %v571 = vld [vmem:[#allocation6 + $0x180] sm:$0xff]
    %v572 = vld [vmem:[#allocation6 + $0x188] sm:$0xff]
    %v573 = vld [vmem:[#allocation6 + $0x190] sm:$0xff]
    %v574 = vld [vmem:[#allocation6 + $0x198] sm:$0xff]
    %v575 = vld [vmem:[#allocation6 + $0x1a0] sm:$0xff]
    %v576 = vld [vmem:[#allocation6 + $0x1a8] sm:$0xff]
    %v577 = vld [vmem:[#allocation6 + $0x1b0] sm:$0xff]
    %v578 = vld [vmem:[#allocation6 + $0x1b8] sm:$0xff]
    %v579 = vld [vmem:[#allocation6 + $0x1c0] sm:$0xff]
    %v580 = vld [vmem:[#allocation6 + $0x1c8] sm:$0xff]
    %v581 = vld [vmem:[#allocation6 + $0x1d0] sm:$0xff]
    %v582 = vld [vmem:[#allocation6 + $0x1d8] sm:$0xff]
    %v583 = vld [vmem:[#allocation6 + $0x1e0] sm:$0xff]
    %v584 = vld [vmem:[#allocation6 + $0x1e8] sm:$0xff]
    %v585 = vld [vmem:[#allocation6 + $0x1f0] sm:$0xff]
    %v586 = vld [vmem:[#allocation6 + $0x1f8] sm:$0xff]
    loop: start=0, step=1, limit=16
    $region30: #{lstm_pooling_forward.1} parent=1 // loop_pre_header
      _
    $region31: #{lstm_pooling_forward.1} parent=1 // loop_header
      %s588 = sphi 0, %s592
      %p589 = scmp.ge.s32.totalorder %s588, 16
      %v593 = vphi 0.0, %v761
      %v594 = vphi 0.0, %v759
      %v595 = vphi 0.0, %v770
    $region32: #{lstm_pooling_forward.1} parent=1 // loop_header_branch
      %591 = sbr.rel (%p589) target = $region36
    $region33: #{lstm_pooling_forward.1} parent=1 // loop_body
      %s596 = smul.u32 %s588, 4
      %s597 = smul.addr %s596, 4
      %s598 = scalar_lea.vmem [#allocation2], %s597
      %v599 = vld [vmem:[%s598] sm:$0xff]
      %v600 = vld [vmem:[%s598 + $0x8] sm:$0xff]
      %601 = vmatpush.msra.mxu0 %v583
      %602 = vmatpush.msra.mxu0 %v579
      %603 = vmatpush.msra.mxu0 %v575
      %604 = vmatpush.msra.mxu0 %v571
      %605 = vmatpush.msra.mxu0 %v567
      %606 = vmatpush.msra.mxu0 %v563
      %607 = vmatpush.msra.mxu0 %v559
      %608 = vmatpush.msra.mxu0 %v555
      %609 = vmatpush.msra.mxu0 %v551
      %610 = vmatpush.msra.mxu0 %v547
      %611 = vmatpush.msra.mxu0 %v543
      %612 = vmatpush.msra.mxu0 %v539
      %613 = vmatpush.msra.mxu0 %v535
      %614 = vmatpush.msra.mxu0 %v531
      %615 = vmatpush.msra.mxu0 %v527
      %616 = vmatpush.msra.mxu0 %v523
      %617 = vmatmul.f32.gmra.mxu0 %v593
      %v618 = vpop.f32.mrf.mxu0
      %v619 = vadd.f32 0.0, %v618
      %620 = vdwg.mxu0
      %621 = vmatpush.msra.mxu0 %v584
      %622 = vmatpush.msra.mxu0 %v580
      %623 = vmatpush.msra.mxu0 %v576
      %624 = vmatpush.msra.mxu0 %v572
      %625 = vmatpush.msra.mxu0 %v568
      %626 = vmatpush.msra.mxu0 %v564
      %627 = vmatpush.msra.mxu0 %v560
      %628 = vmatpush.msra.mxu0 %v556
      %629 = vmatpush.msra.mxu0 %v552
      %630 = vmatpush.msra.mxu0 %v548
      %631 = vmatpush.msra.mxu0 %v544
      %632 = vmatpush.msra.mxu0 %v540
      %633 = vmatpush.msra.mxu0 %v536
      %634 = vmatpush.msra.mxu0 %v532
      %635 = vmatpush.msra.mxu0 %v528
      %636 = vmatpush.msra.mxu0 %v524
      %637 = vmatmul.f32.gmra.mxu0 %v593
      %v638 = vpop.f32.mrf.mxu0
      %v639 = vadd.f32 0.0, %v638
      %640 = vdwg.mxu0
      %641 = vmatpush.msra.mxu0 %v585
      %642 = vmatpush.msra.mxu0 %v581
      %643 = vmatpush.msra.mxu0 %v577
      %644 = vmatpush.msra.mxu0 %v573
      %645 = vmatpush.msra.mxu0 %v569
      %646 = vmatpush.msra.mxu0 %v565
      %647 = vmatpush.msra.mxu0 %v561
      %648 = vmatpush.msra.mxu0 %v557
      %649 = vmatpush.msra.mxu0 %v553
      %650 = vmatpush.msra.mxu0 %v549
      %651 = vmatpush.msra.mxu0 %v545
      %652 = vmatpush.msra.mxu0 %v541
      %653 = vmatpush.msra.mxu0 %v537
      %654 = vmatpush.msra.mxu0 %v533
      %655 = vmatpush.msra.mxu0 %v529
      %656 = vmatpush.msra.mxu0 %v525
      %657 = vmatmul.f32.gmra.mxu0 %v593
      %v658 = vpop.f32.mrf.mxu0
      %v659 = vadd.f32 0.0, %v658
      %660 = vdwg.mxu0
      %661 = vmatpush.msra.mxu0 %v586
      %662 = vmatpush.msra.mxu0 %v582
      %663 = vmatpush.msra.mxu0 %v578
      %664 = vmatpush.msra.mxu0 %v574
      %665 = vmatpush.msra.mxu0 %v570
      %666 = vmatpush.msra.mxu0 %v566
      %667 = vmatpush.msra.mxu0 %v562
      %668 = vmatpush.msra.mxu0 %v558
      %669 = vmatpush.msra.mxu0 %v554
      %670 = vmatpush.msra.mxu0 %v550
      %671 = vmatpush.msra.mxu0 %v546
      %672 = vmatpush.msra.mxu0 %v542
      %673 = vmatpush.msra.mxu0 %v538
      %674 = vmatpush.msra.mxu0 %v534
      %675 = vmatpush.msra.mxu0 %v530
      %676 = vmatpush.msra.mxu0 %v526
      %677 = vmatmul.f32.gmra.mxu0 %v593
      %v678 = vpop.f32.mrf.mxu0
      %v679 = vadd.f32 0.0, %v678
      %680 = vdwg.mxu0
      %v685 = vrot.slane %v639, 4
      %v686 = vrot.slane %v679, 4
      %v687 = vsel %vm410, %v619, %v685
      %v688 = vsel %vm410, %v659, %v686
      %v691 = vadd.f32 %v599, %v687
      %v692 = vadd.f32 %v600, %v688
      %v693 = vsub.f32 0.0, %v691
      %v694 = vmul.f32 %v693, 1.442695
      %v695 = vpow.pop %v694
      %v696 = vadd.f32 %v695, 1.0
      %v697 = vrcp.pop %v696
      %v698 = vmul.f32 %v696, %v697
      %v699 = vsub.f32 1.0, %v698
      %v700 = vmul.f32 %v697, %v699
      %v701 = vadd.f32 %v697, %v700
      %vm702 = vweird.f32 %v696
      %vm703 = vweird.f32 %v697
      %vm704 = vmor %vm702, %vm703
      %v705 = vsel %vm704, %v697, %v701
      %v706 = vand.u32 2147483647, %v696
      %vm707 = vcmp.eq.f32.partialorder %v706, 8.507059e+37
      %v708 = vand.u32 %v696, 2147483648
      %v709 = vor.u32 1.1754944e-38, %v708
      %v710 = vsel %vm707, %v709, %v705
      %v711 = vmul.f32 1.0, %v710
      %v713 = vrot.slane %v691, 4
      %v715 = vsub.f32 0.0, %v713
      %v716 = vmul.f32 %v715, 1.442695
      %v717 = vpow.pop %v716
      %v718 = vadd.f32 %v717, 1.0
      %v719 = vrcp.pop %v718
      %v720 = vmul.f32 %v718, %v719
      %v721 = vsub.f32 1.0, %v720
      %v722 = vmul.f32 %v719, %v721
      %v723 = vadd.f32 %v719, %v722
      %vm724 = vweird.f32 %v718
      %vm725 = vweird.f32 %v719
      %vm726 = vmor %vm724, %vm725
      %v727 = vsel %vm726, %v719, %v723
      %v728 = vand.u32 2147483647, %v718
      %vm729 = vcmp.eq.f32.partialorder %v728, 8.507059e+37
      %v730 = vand.u32 %v718, 2147483648
      %v731 = vor.u32 1.1754944e-38, %v730
      %v732 = vsel %vm729, %v731, %v727
      %v733 = vmul.f32 1.0, %v732
      %v734 = vtanh.pop %v692
      %v736 = vrot.slane %v692, 4
      %v738 = vsub.f32 0.0, %v736
      %v739 = vmul.f32 %v738, 1.442695
      %v740 = vpow.pop %v739
      %v741 = vadd.f32 %v740, 1.0
      %v742 = vrcp.pop %v741
      %v743 = vmul.f32 %v741, %v742
      %v744 = vsub.f32 1.0, %v743
      %v745 = vmul.f32 %v742, %v744
      %v746 = vadd.f32 %v742, %v745
      %vm747 = vweird.f32 %v741
      %vm748 = vweird.f32 %v742
      %vm749 = vmor %vm747, %vm748
      %v750 = vsel %vm749, %v742, %v746
      %v751 = vand.u32 2147483647, %v741
      %vm752 = vcmp.eq.f32.partialorder %v751, 8.507059e+37
      %v753 = vand.u32 %v741, 2147483648
      %v754 = vor.u32 1.1754944e-38, %v753
      %v755 = vsel %vm752, %v754, %v750
      %v756 = vmul.f32 1.0, %v755
      %v757 = vmul.f32 %v733, %v594
      %v758 = vmul.f32 %v711, %v734
      %v759 = vadd.f32 %v757, %v758
      %v760 = vtanh.pop %v759
      %v761 = vmul.f32 %v756, %v760
      %s762 = scalar_lea.vmem %s1, %s596
      %v763 = vld [vmem:[%s762] sm:$0xf]
      %765 = vset.pattern.permute.xlu0 0
      %766 = vperm.xlu0 %765, %v763
      %v767 = vpop.permute.xlu0 %766
      %v769 = vmul.f32 %v767, %v761
      %v770 = vadd.f32 %v595, %v769
    $region34: #{lstm_pooling_forward.1} parent=1 // loop_footer
      %s592 = sadd.s32 1, %s588
    $region35: #{lstm_pooling_forward.1} parent=1 // loop_footer_branch
      %587 = sbr.rel target = $region31
    $region36: #{lstm_pooling_forward.1} parent=1 // loop_exit
      _
    %v771 = vld [vmem:[%s1] sm:$0xf]
    %v772 = vld [vmem:[%s1 + $0x4] sm:$0xf]
    %v773 = vld [vmem:[%s1 + $0x8] sm:$0xf]
    %v774 = vld [vmem:[%s1 + $0xc] sm:$0xf]
    %v775 = vld [vmem:[%s1 + $0x10] sm:$0xf]
    %v776 = vld [vmem:[%s1 + $0x14] sm:$0xf]
    %v777 = vld [vmem:[%s1 + $0x18] sm:$0xf]
    %v778 = vld [vmem:[%s1 + $0x1c] sm:$0xf]
    %v779 = vld [vmem:[%s1 + $0x20] sm:$0xf]
    %v780 = vld [vmem:[%s1 + $0x24] sm:$0xf]
    %v781 = vld [vmem:[%s1 + $0x28] sm:$0xf]
    %v782 = vld [vmem:[%s1 + $0x2c] sm:$0xf]
    %v783 = vld [vmem:[%s1 + $0x30] sm:$0xf]
    %v784 = vld [vmem:[%s1 + $0x34] sm:$0xf]
    %v785 = vld [vmem:[%s1 + $0x38] sm:$0xf]
    %v786 = vld [vmem:[%s1 + $0x3c] sm:$0xf]
    %vm787 = vcmask 3072
    %v788 = vsel %vm787, %v771, 0.0
    %v789 = vsel %vm787, %v772, 0.0
    %v790 = vadd.f32 %v788, %v789
    %v791 = vsel %vm787, %v773, 0.0
    %v792 = vadd.f32 %v790, %v791
    %v793 = vsel %vm787, %v774, 0.0
    %v794 = vadd.f32 %v792, %v793
    %v795 = vsel %vm787, %v775, 0.0
    %v796 = vadd.f32 %v794, %v795
    %v797 = vsel %vm787, %v776, 0.0
    %v798 = vadd.f32 %v796, %v797
    %v799 = vsel %vm787, %v777, 0.0
    %v800 = vadd.f32 %v798, %v799
    %v801 = vsel %vm787, %v778, 0.0
    %v802 = vadd.f32 %v800, %v801
    %v803 = vsel %vm787, %v779, 0.0
    %v804 = vadd.f32 %v802, %v803
    %v805 = vsel %vm787, %v780, 0.0
    %v806 = vadd.f32 %v804, %v805
    %v807 = vsel %vm787, %v781, 0.0
    %v808 = vadd.f32 %v806, %v807
    %v809 = vsel %vm787, %v782, 0.0
    %v810 = vadd.f32 %v808, %v809
    %v811 = vsel %vm787, %v783, 0.0
    %v812 = vadd.f32 %v810, %v811
    %v813 = vsel %vm787, %v784, 0.0
    %v814 = vadd.f32 %v812, %v813
    %v815 = vsel %vm787, %v785, 0.0
    %v816 = vadd.f32 %v814, %v815
    %v817 = vsel %vm787, %v786, 0.0
    %v818 = vadd.f32 %v816, %v817
    %v819 = vmax.f32 %v818, 1e-09
    %821 = vset.pattern.permute.xlu0 0
    %822 = vperm.xlu0 %821, %v819
    %v823 = vpop.permute.xlu0 %822
    %v825 = vrcp.pop %v823
    %v826 = vmul.f32 %v823, %v825
    %v827 = vsub.f32 1.0, %v826
    %v828 = vmul.f32 %v825, %v827
    %v829 = vadd.f32 %v825, %v828
    %vm830 = vweird.f32 %v823
    %vm831 = vweird.f32 %v825
    %vm832 = vmor %vm830, %vm831
    %v833 = vsel %vm832, %v825, %v829
    %v834 = vand.u32 2147483647, %v823
    %vm835 = vcmp.eq.f32.partialorder %v834, 8.507059e+37
    %v836 = vand.u32 %v823, 2147483648
    %v837 = vor.u32 1.1754944e-38, %v836
    %v838 = vsel %vm835, %v837, %v833
    %v839 = vmul.f32 %v595, %v838
    %840 = vst [vmem:[#allocation8] sm:$0xf] %v839
    // Predicated region
    $region37: #{lstm_pooling_forward.1} parent=1 // pred_check
      _
    $region38: #{lstm_pooling_forward.1} parent=1 // pred_check_branch
      %842 = sbr.rel (0) target = $region40
    $region39: #{lstm_pooling_forward.1} parent=1 // pred_region
      %844 = vsyncadd [#allocation5], 0
      %s846 = sshll.u32 [#allocation8], 4
      %s847 = int_to_ptr.vmem [resolvable:$true] %s846
      %s848 = sshll.u32 %s5, 4
      %s849 = int_to_ptr.hbm [resolvable:$true] %s848
      %851 = dma.vmem_to_hbm [thread:$0]  %s847, 64, %s849, [#allocation5]
    $region40: #{lstm_pooling_forward.1} parent=1 // pred_fallthru
      _
    // Predicated region
    $region41: #{lstm_pooling_forward.1} parent=1 // pred_check
      _
    $region42: #{lstm_pooling_forward.1} parent=1 // pred_check_branch
      %853 = sbr.rel (0) target = $region44
    $region43: #{lstm_pooling_forward.1} parent=1 // pred_region
      %855 = dma.done [#allocation5], 64
    $region44: #{lstm_pooling_forward.1} parent=1 // pred_fallthru
      _
    %856 = vsyncpa [#allocation4], 1
    %857 = vsyncpa [#allocation7], 1
    %858 = vsyncpa [#allocation5], 1

</llo_original>
